<compile_context>
chip_gen: v5e
topology: v5e:2x2
jax: 0.10.0
libtpu: 0.0.40
codegen_flags: <defaults>
</compile_context>

<pallas_src>
import functools

import jax
import jax.numpy as jnp
from jax import lax
from jax.experimental import pallas as pl
from jax.experimental.pallas import tpu as pltpu


# ------------------------------ helpers ------------------------------------ #

@functools.lru_cache(maxsize=None)
def _vmem_limit_bytes():
    """Generation-aware scoped-VMEM limit with headroom for compiler scratch."""
    try:
        cap = int(pltpu.get_tpu_info().vmem_capacity_bytes)
    except Exception:
        cap = 64 * 1024 * 1024
    frac = 0.625 if cap <= 64 * 1024 * 1024 else 0.75
    return min(int(cap * frac), 100 * 1024 * 1024)


def _cparams(*sem):
    return pltpu.CompilerParams(dimension_semantics=sem,
                                vmem_limit_bytes=_vmem_limit_bytes())


def _tile(dim, target, align):
    """Pick a block size: full dim if small, else an `align`-multiple dividing dim."""
    if dim <= target:
        return dim
    t = (target // align) * align
    while t >= align:
        if dim % t == 0:
            return t
        t -= align
    return dim


# ----------------------------- Pallas kernels ------------------------------ #

def _rmsnorm_kernel(x_ref, w_ref, o_ref, *, eps):
    x = x_ref[...].astype(jnp.float32)
    var = jnp.mean(x * x, axis=-1, keepdims=True)
    o_ref[...] = (x * jax.lax.rsqrt(var + eps)
                  * w_ref[...].astype(jnp.float32)).astype(o_ref.dtype)


def _add_rmsnorm_kernel(x_ref, r_ref, w_ref, o_ref, res_ref, *, eps):
    x = x_ref[...].astype(jnp.float32) + r_ref[...].astype(jnp.float32)
    res_ref[...] = x.astype(res_ref.dtype)
    var = jnp.mean(x * x, axis=-1, keepdims=True)
    o_ref[...] = (x * jax.lax.rsqrt(var + eps)
                  * w_ref[...].astype(jnp.float32)).astype(o_ref.dtype)


def _matmul_noacc_kernel(a_ref, b_ref, o_ref):
    # Full-K single pass: no accumulator read-modify-write, no K grid axis.
    o_ref[...] = jnp.dot(a_ref[...], b_ref[...],
                         preferred_element_type=jnp.float32).astype(o_ref.dtype)


def _matmul_acc_kernel(a_ref, b_ref, o_ref, acc_ref):
    @pl.when(pl.program_id(2) == 0)
    def _():
        acc_ref[...] = jnp.zeros_like(acc_ref)

    acc_ref[...] += jnp.dot(a_ref[...], b_ref[...],
                            preferred_element_type=jnp.float32)

    @pl.when(pl.program_id(2) == pl.num_programs(2) - 1)
    def _():
        o_ref[...] = acc_ref[...].astype(o_ref.dtype)


def _rope_split_kernel(qkv_ref, cos_ref, sin_ref, q_ref, k_ref, v_ref,
                       *, nH, nKV, D, q_scale):
    """Fused: qkv split + rotary embedding + q scaling + token->head-major relayout."""
    half = D // 2
    cos = cos_ref[...].astype(jnp.float32)                         # (tt, D)
    sin = sin_ref[...].astype(jnp.float32)
    lane = jax.lax.broadcasted_iota(jnp.int32, (1, D), 1)
    sign = jnp.where(lane < half, -1.0, 1.0).astype(jnp.float32)   # rotate-half sign

    def rot(x):  # x: (tt, D) f32, rotate-half via XLU roll (no slice/concat relayout)
        return x * cos + pltpu.roll(x, shift=half, axis=1) * sign * sin

    for h in range(nH):
        xh = qkv_ref[:, h * D:(h + 1) * D].astype(jnp.float32)
        q_ref[h] = (rot(xh) * q_scale).astype(q_ref.dtype)
    for h in range(nKV):
        xh = qkv_ref[:, (nH + h) * D:(nH + h + 1) * D].astype(jnp.float32)
        k_ref[h] = rot(xh).astype(k_ref.dtype)
        v_ref[h] = qkv_ref[:, (nH + nKV + h) * D:(nH + nKV + h + 1) * D]


def _flash_attn_kernel(q_ref, k_ref, v_ref, o_ref, m_ref, l_ref, acc_ref,
                       *, window, tq, tkv, group, D):
    qi = pl.program_id(1)
    ki = pl.program_id(2)

    @pl.when(ki == 0)
    def _():
        m_ref[...] = jnp.full_like(m_ref, -jnp.inf)
        l_ref[...] = jnp.zeros_like(l_ref)
        acc_ref[...] = jnp.zeros_like(acc_ref)

    # kv tiles fully in the causal future of this q tile: compute skipped here and the
    # K/V DMA skipped by the clamped index_map in the wrapper.
    @pl.when(ki * tkv <= qi * tq + (tq - 1))
    def _():
        k = k_ref[0]                                               # (tkv, D) bf16
        v = v_ref[0]
        row = qi * tq + jax.lax.broadcasted_iota(jnp.int32, (tq, tkv), 0)
        col = ki * tkv + jax.lax.broadcasted_iota(jnp.int32, (tq, tkv), 1)
        mask = col <= row
        if window > 0:                                             # sliding window (static)
            mask = jnp.logical_and(mask, col > row - window)
        neg = jnp.float32(-1e30)

        # K/V stay resident while every head of the GQA group is processed.
        for g in range(group):
            s = lax.dot_general(q_ref[g], k, (((1,), (1,)), ((), ())),
                                preferred_element_type=jnp.float32)  # (tq, tkv), no k.T
            s = jnp.where(mask, s, neg)
            m_prev = m_ref[g]                                      # (tq, 1)
            m_new = jnp.maximum(m_prev, jnp.max(s, axis=-1, keepdims=True))
            alpha = jnp.exp(m_prev - m_new)
            p = jnp.where(mask, jnp.exp(s - m_new), 0.0)
            l_ref[g] = alpha * l_ref[g] + jnp.sum(p, axis=-1, keepdims=True)
            pv = jnp.dot(p.astype(v.dtype), v, preferred_element_type=jnp.float32)
            acc_ref[:, g * D:(g + 1) * D] = alpha * acc_ref[:, g * D:(g + 1) * D] + pv
            m_ref[g] = m_new

    @pl.when(ki == pl.num_programs(2) - 1)
    def _():
        for g in range(group):
            inv = pl.reciprocal(l_ref[g], approx=True)             # (tq, 1)
            o_ref[:, g * D:(g + 1) * D] = (acc_ref[:, g * D:(g + 1) * D]
                                           * inv).astype(o_ref.dtype)


def _gmm_kernel(tile_e_ref, x_ref, w1_ref, w3_ref, w2_ref, o_ref, acc_ref):
    """Grouped-GEMM MoE tile: every row tile belongs to exactly one expert
    (tile_e_ref, scalar-prefetched, selects the expert-weight blocks)."""
    del tile_e_ref  # consumed by the index_maps
    f = pl.program_id(1)

    @pl.when(f == 0)
    def _():
        acc_ref[...] = jnp.zeros_like(acc_ref)

    x = x_ref[...]                                                  # (tt, H) bf16
    g = jnp.dot(x, w1_ref[0], preferred_element_type=jnp.float32)   # (tt, tf)
    u = jnp.dot(x, w3_ref[0], preferred_element_type=jnp.float32)
    h = (g * jax.nn.sigmoid(g)) * u                                 # SiLU(gate) * up
    acc_ref[...] += jnp.dot(h.astype(jnp.bfloat16), w2_ref[0],
                            preferred_element_type=jnp.float32)     # (tt, H)

    @pl.when(f == pl.num_programs(1) - 1)
    def _():
        o_ref[...] = acc_ref[...].astype(o_ref.dtype)


# ------------------------------- wrappers ----------------------------------- #

def rmsnorm(x, w, eps, tt=512):
    T, H = x.shape
    tt = _tile(T, tt, 16)
    return pl.pallas_call(
        functools.partial(_rmsnorm_kernel, eps=eps),
        grid=(T // tt,),
        in_specs=[pl.BlockSpec((tt, H), lambda t: (t, 0)),
                  pl.BlockSpec((1, H), lambda t: (0, 0))],
        out_specs=pl.BlockSpec((tt, H), lambda t: (t, 0)),
        out_shape=jax.ShapeDtypeStruct((T, H), x.dtype),
        compiler_params=_cparams("parallel"),
    )(x, w)


def add_rmsnorm(x, res, w, eps, tt=512):
    T, H = x.shape
    tt = _tile(T, tt, 16)
    return pl.pallas_call(
        functools.partial(_add_rmsnorm_kernel, eps=eps),
        grid=(T // tt,),
        in_specs=[pl.BlockSpec((tt, H), lambda t: (t, 0)),
                  pl.BlockSpec((tt, H), lambda t: (t, 0)),
                  pl.BlockSpec((1, H), lambda t: (0, 0))],
        out_specs=(pl.BlockSpec((tt, H), lambda t: (t, 0)),
                   pl.BlockSpec((tt, H), lambda t: (t, 0))),
        out_shape=(jax.ShapeDtypeStruct((T, H), x.dtype),
                   jax.ShapeDtypeStruct((T, H), x.dtype)),
        compiler_params=_cparams("parallel"),
    )(x, res, w)


def matmul(a, b, out_dtype=jnp.bfloat16, tm=512, tn=512, tk=4096):
    M, K = a.shape
    _, N = b.shape
    tm = _tile(M, tm, 16)
    tn = _tile(N, tn, 128)
    tk = _tile(K, tk, 128)
    if tk == K:
        # Full-K single-pass MXU stream (no accumulator RMW, no K grid axis).
        return pl.pallas_call(
            _matmul_noacc_kernel,
            grid=(M // tm, N // tn),
            in_specs=[pl.BlockSpec((tm, K), lambda i, j: (i, 0)),
                      pl.BlockSpec((K, tn), lambda i, j: (0, j))],
            out_specs=pl.BlockSpec((tm, tn), lambda i, j: (i, j)),
            out_shape=jax.ShapeDtypeStruct((M, N), out_dtype),
            compiler_params=_cparams("parallel", "parallel"),
        )(a, b)
    return pl.pallas_call(
        _matmul_acc_kernel,
        grid=(M // tm, N // tn, K // tk),
        in_specs=[pl.BlockSpec((tm, tk), lambda i, j, k: (i, k)),
                  pl.BlockSpec((tk, tn), lambda i, j, k: (k, j))],
        out_specs=pl.BlockSpec((tm, tn), lambda i, j, k: (i, j)),
        out_shape=jax.ShapeDtypeStruct((M, N), out_dtype),
        scratch_shapes=[pltpu.VMEM((tm, tn), jnp.float32)],
        compiler_params=_cparams("parallel", "parallel", "arbitrary"),
    )(a, b)


def rope_split_qkv(qkv, cos, sin, nH, nKV, D, q_scale, tt=512):
    """(T, (nH+2nKV)*D) fused qkv  ->  head-major q (nH,T,D), k (nKV,T,D), v (nKV,T,D)."""
    T = qkv.shape[0]
    tt = _tile(T, tt, 16)
    kern = functools.partial(_rope_split_kernel, nH=nH, nKV=nKV, D=D, q_scale=q_scale)
    return pl.pallas_call(
        kern,
        grid=(T // tt,),
        in_specs=[pl.BlockSpec((tt, (nH + 2 * nKV) * D), lambda t: (t, 0)),
                  pl.BlockSpec((tt, D), lambda t: (t, 0)),
                  pl.BlockSpec((tt, D), lambda t: (t, 0))],
        out_specs=(pl.BlockSpec((nH, tt, D), lambda t: (0, t, 0)),
                   pl.BlockSpec((nKV, tt, D), lambda t: (0, t, 0)),
                   pl.BlockSpec((nKV, tt, D), lambda t: (0, t, 0))),
        out_shape=(jax.ShapeDtypeStruct((nH, T, D), qkv.dtype),
                   jax.ShapeDtypeStruct((nKV, T, D), qkv.dtype),
                   jax.ShapeDtypeStruct((nKV, T, D), qkv.dtype)),
        compiler_params=_cparams("parallel"),
    )(qkv, cos, sin)


def attention(q, k, v, window, tq=512, tkv=512):
    """q: (nH, T, D) [pre-scaled], k/v: (nKV, T, D)  ->  lane-dense (T, nH*D)."""
    nH, T, D = q.shape
    nKV = k.shape[0]
    group = nH // nKV
    tq = _tile(T, tq, 16)
    tkv = _tile(T, tkv, 16)

    def kv_map(kv, qi, ki):
        # Clamp past the causal diagonal: repeated block index => Pallas skips the DMA.
        last_needed = (qi * tq + (tq - 1)) // tkv
        return (kv, jnp.minimum(ki, last_needed), 0)

    kern = functools.partial(_flash_attn_kernel, window=window,
                             tq=tq, tkv=tkv, group=group, D=D)
    return pl.pallas_call(
        kern,
        grid=(nKV, T // tq, T // tkv),
        in_specs=[
            pl.BlockSpec((group, tq, D), lambda kv, qi, ki: (kv, qi, 0)),
            pl.BlockSpec((1, tkv, D), kv_map),
            pl.BlockSpec((1, tkv, D), kv_map),
        ],
        out_specs=pl.BlockSpec((tq, group * D), lambda kv, qi, ki: (qi, kv)),
        out_shape=jax.ShapeDtypeStruct((T, nH * D), q.dtype),
        scratch_shapes=[pltpu.VMEM((group, tq, 1), jnp.float32),
                        pltpu.VMEM((group, tq, 1), jnp.float32),
                        pltpu.VMEM((tq, group * D), jnp.float32)],
        compiler_params=_cparams("parallel", "parallel", "arbitrary"),
    )(q, k, v)


def moe_route(x, topk_w, topk_ids, E, tt):
    """Sort token slots by expert, pad each expert group to a multiple of tt.

    Returns the gathered activations, the row->token map, per-row combine weights,
    and the per-row-tile expert id (scalar-prefetched by the grouped GEMM)."""
    T, K = topk_ids.shape
    S = T * K
    flat_e = topk_ids.reshape(S).astype(jnp.int32)
    flat_t = jnp.repeat(jnp.arange(T, dtype=jnp.int32), K)
    flat_w = topk_w.reshape(S).astype(jnp.float32)

    order = jnp.argsort(flat_e)
    se = flat_e[order]
    st = flat_t[order]
    sw = flat_w[order]

    counts = jnp.bincount(flat_e, length=E).astype(jnp.int32)             # (E,)
    padded = ((counts + tt - 1) // tt) * tt                               # (E,), 0 if unused
    pad_starts = jnp.concatenate([jnp.zeros((1,), jnp.int32),
                                  jnp.cumsum(padded)[:-1].astype(jnp.int32)])
    starts = jnp.concatenate([jnp.zeros((1,), jnp.int32),
                              jnp.cumsum(counts)[:-1].astype(jnp.int32)])
    dest = pad_starts[se] + (jnp.arange(S, dtype=jnp.int32) - starts[se])

    max_rows = ((S + E * (tt - 1) + tt - 1) // tt) * tt                    # static bound
    num_tiles = max_rows // tt

    row_token = jnp.zeros((max_rows,), jnp.int32).at[dest].set(st)
    row_w = jnp.zeros((max_rows,), jnp.float32).at[dest].set(sw)           # 0 on pad rows

    tiles_per_e = padded // tt
    tile_cum = jnp.cumsum(tiles_per_e).astype(jnp.int32)
    tile_e = jnp.searchsorted(tile_cum, jnp.arange(num_tiles, dtype=jnp.int32),
                              side="right")
    tile_e = jnp.minimum(tile_e, E - 1).astype(jnp.int32)

    x_g = x[row_token]                                                     # (max_rows, H)
    return x_g, row_token, row_w, tile_e


def grouped_moe_matmul(x_g, w1, w3, w2, tile_e, tt=128, tf=512):
    """Grouped GEMM over expert-sorted token tiles; expert weights of tiles with no routed
    tokens are never streamed (their experts get zero tiles)."""
    R, H = x_g.shape
    E, _, F = w1.shape
    tf = _tile(F, tf, 128)
    num_tiles = R // tt
    return pl.pallas_call(
        _gmm_kernel,
        grid_spec=pltpu.PrefetchScalarGridSpec(
            num_scalar_prefetch=1,
            grid=(num_tiles, F // tf),
            in_specs=[
                pl.BlockSpec((tt, H), lambda i, f, te: (i, 0)),
                pl.BlockSpec((1, H, tf), lambda i, f, te: (te[i], 0, f)),
                pl.BlockSpec((1, H, tf), lambda i, f, te: (te[i], 0, f)),
                pl.BlockSpec((1, tf, H), lambda i, f, te: (te[i], f, 0)),
            ],
            out_specs=pl.BlockSpec((tt, H), lambda i, f, te: (i, 0)),
            scratch_shapes=[pltpu.VMEM((tt, H), jnp.float32)],
        ),
        out_shape=jax.ShapeDtypeStruct((R, H), jnp.float32),
        compiler_params=_cparams("arbitrary", "arbitrary"),
    )(tile_e, x_g, w1, w3, w2)


# ----------------------------- model definition ----------------------------- #

class Config:
    vocab_size = 128
    hidden_size = 256
    num_attention_heads = 2          # head_dim = 128 (lane-aligned)
    num_key_value_heads = 1          # GQA group = 2
    intermediate_size = 256
    num_local_experts = 4
    num_experts_per_tok = 2
    num_hidden_layers = 2
    rms_norm_eps = 1e-6
    rope_theta = 10000.0
    max_position_embeddings = 64
    sliding_window = None            # -> full causal attention
    pad_token_id = 0


def init_params(cfg, key):
    H = cfg.hidden_size
    nH = cfg.num_attention_heads
    nKV = cfg.num_key_value_heads
    D = H // nH
    F = cfg.intermediate_size
    E = cfg.num_local_experts
    qkv_out = (nH + 2 * nKV) * D

    def nrm(k, shape, scale=0.05):
        return (jax.random.normal(k, shape, dtype=jnp.float32) * scale).astype(jnp.bfloat16)

    keys = jax.random.split(key, 2 + cfg.num_hidden_layers)
    params = {
        "embed": nrm(keys[0], (cfg.vocab_size, H), 1.0),
        "final_norm_w": jnp.ones((1, H), jnp.bfloat16),
        "layers": [],
    }
    for li in range(cfg.num_hidden_layers):
        lk = jax.random.split(keys[2 + li], 8)
        params["layers"].append({
            "input_ln_w": jnp.ones((1, H), jnp.bfloat16),
            "post_ln_w": jnp.ones((1, H), jnp.bfloat16),
            "w_qkv": nrm(lk[0], (H, qkv_out)),
            "w_o": nrm(lk[1], (nH * D, H)),
            "w_gate": nrm(lk[2], (H, E)),
            "w1": nrm(lk[3], (E, H, F)),
            "w3": nrm(lk[4], (E, H, F)),
            "w2": nrm(lk[5], (E, F, H)),
        })
    return params


def rotary_tables(cfg, position_ids):
    D = cfg.hidden_size // cfg.num_attention_heads
    inv_freq = 1.0 / (cfg.rope_theta **
                      (jnp.arange(0, D, 2, dtype=jnp.float32) / D))
    pos = position_ids.reshape(-1).astype(jnp.float32)    # (T,), linear scaling f=1.0
    freqs = pos[:, None] * inv_freq[None, :]              # (T, D/2)
    emb = jnp.concatenate([freqs, freqs], axis=-1)        # (T, D)
    return jnp.cos(emb), jnp.sin(emb)


def mixtral_forward(params, cfg, input_ids, position_ids):
    H = cfg.hidden_size
    nH = cfg.num_attention_heads
    nKV = cfg.num_key_value_heads
    D = H // nH
    E = cfg.num_local_experts
    top_k = cfg.num_experts_per_tok
    window = cfg.sliding_window if cfg.sliding_window else -1
    eps = cfg.rms_norm_eps
    q_scale = 1.0 / (D ** 0.5)
    moe_tt = 128

    B, S = input_ids.shape
    T = B * S

    inputs_embeds = jnp.take(params["embed"], input_ids.reshape(-1), axis=0)  # (T, H)
    cos, sin = rotary_tables(cfg, position_ids)                               # (T, D) f32

    hidden = inputs_embeds
    residual = None

    for lp in params["layers"]:
        # ---- input layernorm (+ residual add) ----
        if residual is None:
            residual = hidden
            hidden = rmsnorm(hidden, lp["input_ln_w"], eps)
        else:
            hidden, residual = add_rmsnorm(hidden, residual, lp["input_ln_w"], eps)

        # ---- self attention ----
        qkv = matmul(hidden, lp["w_qkv"])                             # (T, (nH+2nKV)*D)
        qh, kh, vh = rope_split_qkv(qkv, cos, sin, nH, nKV, D, q_scale)
        attn = attention(qh, kh, vh, window)                          # (T, nH*D)
        hidden = matmul(attn, lp["w_o"])                              # (T, H)

        # ---- post attention layernorm ----
        hidden, residual = add_rmsnorm(hidden, residual, lp["post_ln_w"], eps)

        # ---- sparse MoE block ----
        router_logits = jnp.dot(hidden.astype(jnp.float32),
                                lp["w_gate"].astype(jnp.float32))     # tiny (T, E): XLA
        probs = jax.nn.softmax(router_logits, axis=-1)
        topk_w, topk_ids = jax.lax.top_k(probs, top_k)
        topk_w = topk_w / jnp.sum(topk_w, axis=-1, keepdims=True)     # renormalize

        x_g, row_token, row_w, tile_e = moe_route(hidden, topk_w, topk_ids, E, moe_tt)
        y_g = grouped_moe_matmul(x_g, lp["w1"], lp["w3"], lp["w2"], tile_e,
                                 tt=moe_tt, tf=512)                   # (R, H) f32
        moe_out = jnp.zeros((T, H), jnp.float32).at[row_token].add(row_w[:, None] * y_g)
        hidden = moe_out.astype(inputs_embeds.dtype)

    # ---- final norm (with residual add) ----
    hidden, _ = add_rmsnorm(hidden, residual, params["final_norm_w"], eps)
    return hidden.reshape(B, S, H)


# --------------------------------- driver ----------------------------------- #

if __name__ == "__main__":
    cfg = Config()
    key = jax.random.PRNGKey(0)
    pkey, ikey = jax.random.split(key)

    params = init_params(cfg, pkey)

    B, S = 1, 8
    input_ids = jax.random.randint(ikey, (B, S), 0, cfg.vocab_size, dtype=jnp.int32)
    position_ids = jnp.arange(S, dtype=jnp.int32)[None, :]

    out = mixtral_forward(params, cfg, input_ids, position_ids)
    out = jax.block_until_ready(out)

    assert out.shape == (B, S, cfg.hidden_size)
    assert bool(jnp.all(jnp.isfinite(out.astype(jnp.float32))))
    print("KERNEL_OK")
</pallas_src>

<mosaic_0001>
module attributes {stable_mosaic.version = 11 : i64} {
  func.func @_rmsnorm_kernel(%arg0: i32, %arg1: memref<8x256xbf16, #tpu.memory_space<vmem>>, %arg2: memref<1x256xbf16, #tpu.memory_space<vmem>>, %arg3: memref<8x256xbf16, #tpu.memory_space<vmem>>) attributes {dimension_semantics = [#tpu.dimension_semantics<parallel>], iteration_bounds = array<i64: 1>, scalar_prefetch = 0 : i64, scratch_operands = 0 : i64, tpu.core_type = #tpu.core_type<tc>, window_params = [{transform_indices = @transform_0, window_bounds = array<i64: 8, 256>}, {pipeline_mode = #tpu.pipeline_mode<synchronous>, transform_indices = @transform_1, window_bounds = array<i64: 1, 256>}, {transform_indices = @transform_2, window_bounds = array<i64: 8, 256>}]} {
    %c0 = arith.constant 0 : index
    %c0_0 = arith.constant 0 : index
    %0 = vector.load %arg1[%c0, %c0_0] : memref<8x256xbf16, #tpu.memory_space<vmem>>, vector<8x256xbf16>
    %1 = arith.extf %0 : vector<8x256xbf16> to vector<8x256xf32>
    %2 = arith.mulf %1, %1 : vector<8x256xf32>
    %cst = arith.constant dense<0.000000e+00> : vector<8xf32>
    %3 = vector.multi_reduction <add>, %2, %cst [1] : vector<8x256xf32> to vector<8xf32>
    %4 = vector.shape_cast %3 : vector<8xf32> to vector<8x1xf32>
    %cst_1 = arith.constant 2.560000e+02 : f32
    %5 = vector.broadcast %cst_1 : f32 to vector<8x1xf32>
    %6 = arith.divf %4, %5 : vector<8x1xf32>
    %cst_2 = arith.constant 9.99999997E-7 : f32
    %7 = vector.broadcast %cst_2 : f32 to vector<8x1xf32>
    %8 = arith.addf %6, %7 : vector<8x1xf32>
    %9 = math.rsqrt %8 : vector<8x1xf32>
    %10 = vector.broadcast %9 : vector<8x1xf32> to vector<8x256xf32>
    %11 = arith.mulf %1, %10 : vector<8x256xf32>
    %c0_3 = arith.constant 0 : index
    %c0_4 = arith.constant 0 : index
    %12 = vector.load %arg2[%c0_3, %c0_4] : memref<1x256xbf16, #tpu.memory_space<vmem>>, vector<1x256xbf16>
    %13 = arith.extf %12 : vector<1x256xbf16> to vector<1x256xf32>
    %14 = vector.broadcast %13 : vector<1x256xf32> to vector<8x256xf32>
    %15 = arith.mulf %11, %14 : vector<8x256xf32>
    %16 = arith.truncf %15 : vector<8x256xf32> to vector<8x256xbf16>
    %c0_5 = arith.constant 0 : index
    %c0_6 = arith.constant 0 : index
    %17 = vector.load %arg3[%c0_5, %c0_6] : memref<8x256xbf16, #tpu.memory_space<vmem>>, vector<8x256xbf16>
    tpu.vector_store %arg3[%c0_5, %c0_6], %16 {strides = array<i32>} : memref<8x256xbf16, #tpu.memory_space<vmem>>, vector<8x256xbf16>,
    return
  }
  func.func @transform_0(%arg0: i32) -> (i32, i32) {
    %c0_i32 = arith.constant 0 : i32
    %c0_i32_0 = arith.constant 0 : i32
    return %arg0, %c0_i32 : i32, i32
  }
  func.func @transform_1(%arg0: i32) -> (i32, i32) {
    %c0_i32 = arith.constant 0 : i32
    %c0_i32_0 = arith.constant 0 : i32
    %c0_i32_1 = arith.constant 0 : i32
    return %c0_i32, %c0_i32_0 : i32, i32
  }
  func.func @transform_2(%arg0: i32) -> (i32, i32) {
    %c0_i32 = arith.constant 0 : i32
    %c0_i32_0 = arith.constant 0 : i32
    return %arg0, %c0_i32 : i32, i32
  }
}

</mosaic_0001>

<llo_original>
// kernel: tpu_custom_call.1
$region0: #{tpu_custom_call.1}
  #allocation0 [shape = 'u32[]', space=smem, size = 0x4, offset = 0x4, fixed_abs, tag = 'smem constant byte address 0x4 - core index']
  #allocation1 [shape = 'u32[72,128]{1,0:T(1,128)}', space=vmem, size = 0x9000, scoped, tag = 'internal scratch']
  %s0 = inlined_call_operand.hbm [shape: bf16[8,256], index: 0, kind: input, shape index: {}]
  %s1 = inlined_call_operand.hbm [shape: bf16[1,256], index: 1, kind: input, shape index: {}]
  %s2 = inlined_call_operand.hbm [shape: bf16[8,256], index: 2, kind: output, shape index: {}]
  %s3 = sld [smem:[#allocation0]]
  $region26: #{tpu_custom_call.1} parent=0
    _
  %s5 = ssub.s32 1, %s3
  %s6 = scalar_select 0, %s5, %s3
  $region1: #{tpu_custom_call.1} parent=0
    #allocation2 [shape = 'u8[4096]{0}', space=vmem, size = 0x1000, scoped, tag = 'input window, operand 0, single buffered']
    #allocation3 [shape = 's32[1]{0}', space=sflag, size = 0x4, scoped, tag = 'scoped memory for tpu_custom_call.1']
    #allocation4 [shape = 's32[1]{0}', space=sflag, size = 0x4, scoped, tag = 'scoped memory for tpu_custom_call.1']
    #allocation5 [shape = 'u8[1024]{0}', space=vmem, size = 0x400, scoped, tag = 'input window, operand 1, single buffered']
    #allocation6 [shape = 's32[1]{0}', space=sflag, size = 0x4, scoped, tag = 'scoped memory for tpu_custom_call.1']
    #allocation7 [shape = 'u8[4096]{0}', space=vmem, size = 0x1000, scoped, tag = 'output window, operand 0, single buffered']
    %7 = vsyncpa [#allocation3], 0
    %8 = vsyncpa [#allocation6], 0
    %9 = vsyncpa [#allocation4], 0
    // Predicated region
    $region2: #{tpu_custom_call.1} parent=1 // pred_check
      _
    $region3: #{tpu_custom_call.1} parent=1 // pred_check_branch
      %11 = sbr.rel (0) target = $region5
    $region4: #{tpu_custom_call.1} parent=1 // pred_region
      %13 = vsyncadd [#allocation3], 0
      %s15 = sshll.u32 %s0, 4
      %s16 = int_to_ptr.hbm [resolvable:$true] %s15
      %s17 = sshll.u32 [#allocation2], 4
      %s18 = int_to_ptr.vmem [resolvable:$true] %s17
      %20 = dma.hbm_to_vmem [thread:$0]  %s16, 128, %s18, [#allocation3]
    $region5: #{tpu_custom_call.1} parent=1 // pred_fallthru
      _
    // Predicated region
    $region6: #{tpu_custom_call.1} parent=1 // pred_check
      _
    $region7: #{tpu_custom_call.1} parent=1 // pred_check_branch
      %22 = sbr.rel (0) target = $region9
    $region8: #{tpu_custom_call.1} parent=1 // pred_region
      %24 = vsyncadd [#allocation6], 0
      %s26 = sshll.u32 %s1, 4
      %s27 = int_to_ptr.hbm [resolvable:$true] %s26
      %s28 = sshll.u32 [#allocation5], 4
      %s29 = int_to_ptr.vmem [resolvable:$true] %s28
      %31 = dma.hbm_to_vmem [thread:$0]  %s27, 32, %s29, [#allocation6]
    $region9: #{tpu_custom_call.1} parent=1 // pred_fallthru
      _
    // Predicated region
    $region10: #{tpu_custom_call.1} parent=1 // pred_check
      _
    $region11: #{tpu_custom_call.1} parent=1 // pred_check_branch
      %33 = sbr.rel (0) target = $region13
    $region12: #{tpu_custom_call.1} parent=1 // pred_region
      %35 = dma.done [#allocation3], 128
    $region13: #{tpu_custom_call.1} parent=1 // pred_fallthru
      _
    // Predicated region
    $region14: #{tpu_custom_call.1} parent=1 // pred_check
      _
    $region15: #{tpu_custom_call.1} parent=1 // pred_check_branch
      %37 = sbr.rel (0) target = $region17
    $region16: #{tpu_custom_call.1} parent=1 // pred_region
      %39 = dma.done [#allocation6], 32
    $region17: #{tpu_custom_call.1} parent=1 // pred_fallthru
      _
    %v40 = vld [vmem:[#allocation2] sm:$0xff]
    %v41 = vunpack.c.l.bf16 %v40
    %v42 = vunpack.c.h.bf16 %v40
    %v43 = vmul.f32 %v41, %v41
    %v44 = vmul.f32 %v42, %v42
    %v45 = vadd.f32 %v43, %v44
    %46 = vadd.xlane.f32.xlu0 %v45
    %v47 = vpop.xlane.xlu0 %46
    %v48 = vrcp.pop 256.0
    %v49 = vmul.f32 256.0, %v48
    %v50 = vsub.f32 1.0, %v49
    %v51 = vmul.f32 %v48, %v50
    %v52 = vadd.f32 %v48, %v51
    %vm53 = vweird.f32 %v48
    %v54 = vsel %vm53, %v48, %v52
    %v55 = vmul.f32 %v47, %v54
    %v56 = vadd.f32 %v55, 1e-06
    %v57 = vrsqrt.pop %v56
    %v58 = vmul.f32 %v57, %v56
    %v59 = vmul.f32 %v58, %v57
    %v60 = vmul.f32 0.5, %v59
    %v61 = vsub.f32 1.5, %v60
    %v62 = vmul.f32 %v57, %v61
    %vm63 = vweird.f32 %v56
    %vm64 = vweird.f32 %v57
    %vm65 = vmor %vm63, %vm64
    %v66 = vsel %vm65, %v57, %v62
    %v67 = vmul.f32 %v41, %v66
    %v68 = vmul.f32 %v42, %v66
    %v69 = vld [vmem:[#allocation5] sm:$0x3]
    %v70 = vunpack.c.l.bf16 %v69
    %v72 = vperm.slane %v70, 0
    %v73 = vperm.slane %v70, 2
    %v76 = vperm.slane %v72, 0
    %v77 = vperm.slane %v73, 0
    %v78 = vmul.f32 %v67, %v76
    %v79 = vmul.f32 %v68, %v77
    %v80 = vpack.c.bf16 %v79, %v78
    %81 = vst [vmem:[#allocation7] sm:$0xff] %v80
    // Predicated region
    $region18: #{tpu_custom_call.1} parent=1 // pred_check
      _
    $region19: #{tpu_custom_call.1} parent=1 // pred_check_branch
      %83 = sbr.rel (0) target = $region21
    $region20: #{tpu_custom_call.1} parent=1 // pred_region
      %85 = vsyncadd [#allocation4], 0
      %s87 = sshll.u32 [#allocation7], 4
      %s88 = int_to_ptr.vmem [resolvable:$true] %s87
      %s89 = sshll.u32 %s2, 4
      %s90 = int_to_ptr.hbm [resolvable:$true] %s89
      %92 = dma.vmem_to_hbm [thread:$0]  %s88, 128, %s90, [#allocation4]
    $region21: #{tpu_custom_call.1} parent=1 // pred_fallthru
      _
    // Predicated region
    $region22: #{tpu_custom_call.1} parent=1 // pred_check
      _
    $region23: #{tpu_custom_call.1} parent=1 // pred_check_branch
      %94 = sbr.rel (0) target = $region25
    $region24: #{tpu_custom_call.1} parent=1 // pred_region
      %96 = dma.done [#allocation4], 128
    $region25: #{tpu_custom_call.1} parent=1 // pred_fallthru
      _
    %97 = vsyncpa [#allocation3], 1
    %98 = vsyncpa [#allocation6], 1
    %99 = vsyncpa [#allocation4], 1

</llo_original>
